<compile_context>
chip_gen: v6e
topology: v6e:2x2x1
jax: 0.10.0
libtpu: 0.0.40
codegen_flags: <defaults>
</compile_context>

<pallas_src>
import math

import jax
import jax.numpy as jnp
from jax import lax
from jax.experimental import pallas as pl
from jax.experimental.pallas import tpu as pltpu


def _rope_kernel(pos_ref, inv_ref, cos_ref, sin_ref):
    # pos_ref: (1, TR, G) int32      -- G consecutive positions packed per row
    # inv_ref: (1, G*dim) float32    -- concat([inv,inv]) tiled G times (resident)
    # cos_ref / sin_ref: (1, TR, G*dim) out_dtype
    _, tr, g = pos_ref.shape
    gdim = cos_ref.shape[-1]
    dim = gdim // g

    pos = pos_ref[0].astype(jnp.float32)            # (TR, G)
    inv = inv_ref[...]                              # (1, G*dim)

    if g == 1:
        # Natural layout fallback: plain lane-broadcast multiply.
        freqs = pos * inv                           # (TR,1)*(1,dim) -> (TR, dim)
    else:
        # pos_lane[r, l] = pos[r, l // dim] via a lane "staircase" of selects.
        # Pure VPU work (no cross-lane relayout, no MXU / precision issues).
        lane = lax.broadcasted_iota(jnp.int32, (tr, gdim), 1)
        pos_lane = jnp.broadcast_to(pos[:, 0:1], (tr, gdim))
        for gg in range(1, g):
            pos_lane = jnp.where(lane >= gg * dim, pos[:, gg:gg + 1], pos_lane)
        freqs = pos_lane * inv                      # (TR, G*dim)

    # inv already encodes emb = concat([freqs, freqs]); cos/sin run on fully
    # lane-dense vregs, then cast to the activation dtype before the store.
    cos_ref[0] = jnp.cos(freqs).astype(cos_ref.dtype)
    sin_ref[0] = jnp.sin(freqs).astype(sin_ref.dtype)


def _choose_row_tile(num_rows, gdim, out_itemsize, vmem_budget_bytes=8 << 20):
    """Largest multiple-of-8 packed-row tile whose double-buffered cos+sin
    output blocks plus fp32/int32 temporaries fit a conservative VMEM budget
    (safe for v5e's 16 MiB scoped default and v7x's 64 MiB physical VMEM)."""
    # Per packed row: 2 outputs x 2 pipeline buffers x gdim x out_bytes
    #                 + ~4 full-width 32-bit temporaries (iota, pos_lane,
    #                   freqs, cos/sin before cast).
    per_row = 4 * gdim * out_itemsize + 4 * gdim * 4
    tr = vmem_budget_bytes // max(per_row, 1)
    if tr >= num_rows:
        return num_rows
    return max(8, (tr // 8) * 8)


def phi3_rotary_embedding(position_ids, inv_freq, *, dim, out_dtype):
    """position_ids: (B, S) integer array; inv_freq: (dim//2,) float32.
    Returns (cos, sin), each (B, S, dim) in out_dtype."""
    B, S = position_ids.shape
    half = dim // 2
    assert inv_freq.shape == (half,)

    # Packing factor: smallest G with (G*dim) % 128 == 0 -> unmasked stores.
    g = 128 // math.gcd(dim, 128)
    if g > 32 or (S % g) != 0:
        g = 1                                       # natural-layout fallback
    gdim = g * dim
    rows = S // g

    pos_packed = position_ids.astype(jnp.int32).reshape(B, rows, g)
    inv_row = jnp.concatenate([inv_freq, inv_freq]).astype(jnp.float32)  # (dim,)
    inv_tiled = jnp.tile(inv_row, g).reshape(1, gdim)                    # (1, G*dim)

    tr = _choose_row_tile(rows, gdim, jnp.dtype(out_dtype).itemsize)
    grid = (B, pl.cdiv(rows, tr))

    out_shape = (
        jax.ShapeDtypeStruct((B, rows, gdim), out_dtype),
        jax.ShapeDtypeStruct((B, rows, gdim), out_dtype),
    )

    cos_p, sin_p = pl.pallas_call(
        _rope_kernel,
        out_shape=out_shape,
        grid=grid,
        in_specs=[
            pl.BlockSpec((1, tr, g), lambda b, r: (b, r, 0)),      # packed positions
            pl.BlockSpec((1, gdim), lambda b, r: (0, 0)),          # inv (resident)
        ],
        out_specs=(
            pl.BlockSpec((1, tr, gdim), lambda b, r: (b, r, 0)),   # cos (lane dense)
            pl.BlockSpec((1, tr, gdim), lambda b, r: (b, r, 0)),   # sin (lane dense)
        ),
        compiler_params=pltpu.CompilerParams(
            dimension_semantics=("parallel", "parallel")),
    )(pos_packed, inv_tiled)

    # Contiguous row-major reshape (B, S/G, G*dim) -> (B, S, dim): free bitcast.
    return cos_p.reshape(B, S, dim), sin_p.reshape(B, S, dim)


if __name__ == "__main__":
    # Small, deterministic example consistent with the module's forward.
    batch = 2
    seq = 8
    dim = 32            # rotary head dim
    base = 10000.0
    x_dtype = jnp.bfloat16   # dtype of the (values-unused) activation x

    key = jax.random.PRNGKey(0)
    # x only contributes its dtype/device in the PyTorch module.
    x = jax.random.normal(key, (batch, seq, dim), dtype=x_dtype)
    # Non-trivial position ids (per-batch offset) to exercise the packing path.
    position_ids = (jnp.broadcast_to(jnp.arange(seq, dtype=jnp.int32), (batch, seq))
                    + 5 * jnp.arange(batch, dtype=jnp.int32)[:, None])

    # Deterministic "parameter" init, same formula as the PyTorch buffer:
    # inv_freq = 1 / base ** (arange(0, dim, 2) / dim)
    inv_freq = 1.0 / (base ** (jnp.arange(0, dim, 2, dtype=jnp.float32) / dim))

    cos, sin = phi3_rotary_embedding(
        position_ids, inv_freq, dim=dim, out_dtype=x.dtype)
    jax.block_until_ready((cos, sin))

    # Reference in plain JAX (mirrors the PyTorch math in fp32, then cast).
    freqs_ref = (position_ids.astype(jnp.float32)[:, :, None]
                 * inv_freq[None, None, :])
    emb_ref = jnp.concatenate([freqs_ref, freqs_ref], axis=-1)
    cos_ref = jnp.cos(emb_ref).astype(x.dtype)
    sin_ref = jnp.sin(emb_ref).astype(x.dtype)

    assert cos.shape == (batch, seq, dim) and cos.dtype == x.dtype
    assert sin.shape == (batch, seq, dim) and sin.dtype == x.dtype
    assert jnp.allclose(cos.astype(jnp.float32), cos_ref.astype(jnp.float32),
                        atol=1e-2, rtol=1e-2)
    assert jnp.allclose(sin.astype(jnp.float32), sin_ref.astype(jnp.float32),
                        atol=1e-2, rtol=1e-2)

    print("KERNEL_OK")
</pallas_src>

<mosaic_0001>
module attributes {stable_mosaic.version = 11 : i64} {
  func.func @_rope_kernel(%arg0: i32, %arg1: i32, %arg2: memref<1x2x4xi32, #tpu.memory_space<vmem>>, %arg3: memref<1x128xf32, #tpu.memory_space<vmem>>, %arg4: memref<1x2x128xbf16, #tpu.memory_space<vmem>>, %arg5: memref<1x2x128xbf16, #tpu.memory_space<vmem>>) attributes {dimension_semantics = [#tpu.dimension_semantics<parallel>, #tpu.dimension_semantics<parallel>], iteration_bounds = array<i64: 2, 1>, scalar_prefetch = 0 : i64, scratch_operands = 0 : i64, tpu.core_type = #tpu.core_type<tc>, window_params = [{transform_indices = @transform_0, window_bounds = array<i64: 1, 2, 4>}, {pipeline_mode = #tpu.pipeline_mode<synchronous>, transform_indices = @transform_1, window_bounds = array<i64: 1, 128>}, {transform_indices = @transform_2, window_bounds = array<i64: 1, 2, 128>}, {transform_indices = @transform_3, window_bounds = array<i64: 1, 2, 128>}]} {
    %c0 = arith.constant 0 : index
    %c0_0 = arith.constant 0 : index
    %c0_1 = arith.constant 0 : index
    %0 = vector.load %arg2[%c0, %c0_0, %c0_1] : memref<1x2x4xi32, #tpu.memory_space<vmem>>, vector<1x2x4xi32>
    %1 = vector.shape_cast %0 : vector<1x2x4xi32> to vector<2x4xi32>
    %2 = arith.sitofp %1 : vector<2x4xi32> to vector<2x4xf32>
    %c0_2 = arith.constant 0 : index
    %c0_3 = arith.constant 0 : index
    %3 = vector.load %arg3[%c0_2, %c0_3] : memref<1x128xf32, #tpu.memory_space<vmem>>, vector<1x128xf32>
    %4 = tpu.iota {dimensions = array<i32: 1>} : vector<2x128xi32>
    %5 = vector.extract_strided_slice %2 {offsets = [0, 0], sizes = [2, 1], strides = [1, 1]} : vector<2x4xf32> to vector<2x1xf32>
    %6 = vector.shape_cast %5 : vector<2x1xf32> to vector<2x1xf32>
    %7 = vector.broadcast %6 : vector<2x1xf32> to vector<2x128xf32>
    %c32_i32 = arith.constant 32 : i32
    %8 = vector.broadcast %c32_i32 : i32 to vector<2x128xi32>
    %9 = arith.cmpi sge, %4, %8 : vector<2x128xi32>
    %10 = vector.extract_strided_slice %2 {offsets = [0, 1], sizes = [2, 1], strides = [1, 1]} : vector<2x4xf32> to vector<2x1xf32>
    %11 = vector.shape_cast %10 : vector<2x1xf32> to vector<2x1xf32>
    %12 = vector.broadcast %11 : vector<2x1xf32> to vector<2x128xf32>
    %13 = arith.select %9, %12, %7 : vector<2x128xi1>, vector<2x128xf32>
    %c64_i32 = arith.constant 64 : i32
    %14 = vector.broadcast %c64_i32 : i32 to vector<2x128xi32>
    %15 = arith.cmpi sge, %4, %14 : vector<2x128xi32>
    %16 = vector.extract_strided_slice %2 {offsets = [0, 2], sizes = [2, 1], strides = [1, 1]} : vector<2x4xf32> to vector<2x1xf32>
    %17 = vector.shape_cast %16 : vector<2x1xf32> to vector<2x1xf32>
    %18 = vector.broadcast %17 : vector<2x1xf32> to vector<2x128xf32>
    %19 = arith.select %15, %18, %13 : vector<2x128xi1>, vector<2x128xf32>
    %c96_i32 = arith.constant 96 : i32
    %20 = vector.broadcast %c96_i32 : i32 to vector<2x128xi32>
    %21 = arith.cmpi sge, %4, %20 : vector<2x128xi32>
    %22 = vector.extract_strided_slice %2 {offsets = [0, 3], sizes = [2, 1], strides = [1, 1]} : vector<2x4xf32> to vector<2x1xf32>
    %23 = vector.shape_cast %22 : vector<2x1xf32> to vector<2x1xf32>
    %24 = vector.broadcast %23 : vector<2x1xf32> to vector<2x128xf32>
    %25 = arith.select %21, %24, %19 : vector<2x128xi1>, vector<2x128xf32>
    %26 = vector.broadcast %3 : vector<1x128xf32> to vector<2x128xf32>
    %27 = arith.mulf %25, %26 : vector<2x128xf32>
    %28 = math.cos %27 : vector<2x128xf32>
    %29 = arith.truncf %28 : vector<2x128xf32> to vector<2x128xbf16>
    %c0_4 = arith.constant 0 : index
    %c0_5 = arith.constant 0 : index
    %c0_6 = arith.constant 0 : index
    %30 = vector.load %arg4[%c0_4, %c0_5, %c0_6] : memref<1x2x128xbf16, #tpu.memory_space<vmem>>, vector<1x2x128xbf16>
    %31 = vector.shape_cast %30 : vector<1x2x128xbf16> to vector<2x128xbf16>
    %32 = vector.shape_cast %29 : vector<2x128xbf16> to vector<1x2x128xbf16>
    tpu.vector_store %arg4[%c0_4, %c0_5, %c0_6], %32 {strides = array<i32>} : memref<1x2x128xbf16, #tpu.memory_space<vmem>>, vector<1x2x128xbf16>,
    %33 = math.sin %27 : vector<2x128xf32>
    %34 = arith.truncf %33 : vector<2x128xf32> to vector<2x128xbf16>
    %c0_7 = arith.constant 0 : index
    %c0_8 = arith.constant 0 : index
    %c0_9 = arith.constant 0 : index
    %35 = vector.load %arg5[%c0_7, %c0_8, %c0_9] : memref<1x2x128xbf16, #tpu.memory_space<vmem>>, vector<1x2x128xbf16>
    %36 = vector.shape_cast %35 : vector<1x2x128xbf16> to vector<2x128xbf16>
    %37 = vector.shape_cast %34 : vector<2x128xbf16> to vector<1x2x128xbf16>
    tpu.vector_store %arg5[%c0_7, %c0_8, %c0_9], %37 {strides = array<i32>} : memref<1x2x128xbf16, #tpu.memory_space<vmem>>, vector<1x2x128xbf16>,
    return
  }
  func.func @transform_0(%arg0: i32, %arg1: i32) -> (i32, i32, i32) {
    %c0_i32 = arith.constant 0 : i32
    %c0_i32_0 = arith.constant 0 : i32
    return %arg0, %arg1, %c0_i32 : i32, i32, i32
  }
  func.func @transform_1(%arg0: i32, %arg1: i32) -> (i32, i32) {
    %c0_i32 = arith.constant 0 : i32
    %c0_i32_0 = arith.constant 0 : i32
    %c0_i32_1 = arith.constant 0 : i32
    return %c0_i32, %c0_i32_0 : i32, i32
  }
  func.func @transform_2(%arg0: i32, %arg1: i32) -> (i32, i32, i32) {
    %c0_i32 = arith.constant 0 : i32
    %c0_i32_0 = arith.constant 0 : i32
    return %arg0, %arg1, %c0_i32 : i32, i32, i32
  }
  func.func @transform_3(%arg0: i32, %arg1: i32) -> (i32, i32, i32) {
    %c0_i32 = arith.constant 0 : i32
    %c0_i32_0 = arith.constant 0 : i32
    return %arg0, %arg1, %c0_i32 : i32, i32, i32
  }
}

</mosaic_0001>

<llo_original>
// kernel: tpu_custom_call.1
$region0: #{tpu_custom_call.1}
  #allocation0 [shape = 'u32[]', space=smem, size = 0x4, offset = 0x4, fixed_abs, tag = 'smem constant byte address 0x4 - core index']
  #allocation1 [shape = 'u32[144,128]{1,0:T(1,128)}', space=vmem, size = 0x12000, scoped, tag = 'internal scratch']
  %s0 = inlined_call_operand.hbm [shape: s32[2,2,4], index: 0, kind: input, shape index: {}]
  %s1 = inlined_call_operand.vmem [shape: f32[1,128], index: 1, kind: input, shape index: {}]
  %s2 = inlined_call_operand.hbm [shape: bf16[2,2,128], index: 2, kind: output, shape index: {0}]
  %s3 = inlined_call_operand.hbm [shape: bf16[2,2,128], index: 3, kind: output, shape index: {1}]
  %4 = xla_tuple %s2, %s3
  %s5 = sld [smem:[#allocation0]]
  $region53: #{tpu_custom_call.1} parent=0
    _
  %s7 = ssub.s32 1, %s5
  %s8 = scalar_select 0, %s7, %s5
  $region1: #{tpu_custom_call.1} parent=0
    #allocation2 [shape = 'u8[2048]{0}', space=vmem, size = 0x800, scoped, tag = 'input window, operand 0']
    #allocation3 [shape = 's32[2]{0}', space=sflag, size = 0x8, scoped, tag = 'scoped memory for tpu_custom_call.1']
    #allocation4 [shape = 's32[2]{0}', space=sflag, size = 0x8, scoped, tag = 'scoped memory for tpu_custom_call.1']
    #allocation5 [shape = 'u8[1024]{0}', space=vmem, size = 0x400, scoped, tag = 'output window, operand 0']
    #allocation6 [shape = 'u8[1024]{0}', space=vmem, size = 0x400, scoped, tag = 'output window, operand 1']
    #allocation7 [shape = 's32[2]{0}', space=sflag, size = 0x8, scoped, tag = 'scoped memory for tpu_custom_call.1']
    %9 = vsyncpa [#allocation3], 0
    %s10 = scalar_lea.sflag [#allocation3], 1
    %11 = vsyncpa %s10, 0
    %12 = vsyncpa [#allocation4], 0
    %s13 = scalar_lea.sflag [#allocation4], 1
    %14 = vsyncpa %s13, 0
    %15 = vsyncpa [#allocation7], 0
    %s16 = scalar_lea.sflag [#allocation7], 1
    %17 = vsyncpa %s16, 0
    loop: start=0, step=1, limit=4
    $region2: #{tpu_custom_call.1} parent=1 // loop_pre_header
      _
    $region3: #{tpu_custom_call.1} parent=1 // loop_header
      %s19 = sphi 0, %s23
      %p20 = scmp.ge.s32.totalorder %s19, 4
      %s26 = sphi 0, %s38
      %s27 = sphi 0, %s34
      %s28 = sphi 0, %s26
      %s29 = sphi 0, %s27
      %s30 = sphi 0, %s28
      %s31 = sphi 0, %s29
      %s43 = sphi 0, %s45
      %s46 = sphi 0, %s43
      %s47 = sphi 0, %s46
      %s63 = sphi 0, %s47
      %s67 = sphi 0, %s67
      %s69 = sphi 0, %s67
      %s70 = sphi 0, %s69
      %s84 = sphi 0, %s70
      %s92 = sphi 0, %s94
      %s95 = sphi 0, %s92
      %s96 = sphi 0, %s95
      %s112 = sphi 0, %s96
      %s120 = sphi 0, %s122
      %s123 = sphi 0, %s120
      %s124 = sphi 0, %s123
      %s140 = sphi 0, %s124
    $region4: #{tpu_custom_call.1} parent=1 // loop_header_branch
      %22 = sbr.rel (%p20) target = $region8
    $region5: #{tpu_custom_call.1} parent=1 // loop_body
      %s24 = ssub.s32 %s19, 1
      %s25 = ssub.s32 %s19, 2
      %s32 = sadd.s32 1, %s27
      %p33 = scmp.ge.s32.totalorder %s32, 1
      %s34 = scalar_select %p33, 0, %s32
      %s35 = sadd.s32 1, %s26
      %s36 = scalar_select %p33, %s35, %s26
      %p37 = scmp.ge.s32.totalorder %s36, 2
      %s38 = scalar_select %p37, 0, %s36
      %s39 = ssub.s32 %s26, %s38
      %s40 = ssub.s32 %s27, %s34
      %s41 = sor.u32 %s39, %s40
      %p42 = scmp.eq.s32.totalorder %s41, 0
      %s44 = sadd.s32 %s43, 1
      %s45 = scalar_select %p42, %s43, %s44
      %p48 = pneg %p42
      %p49 = scmp.eq.s32.totalorder %s19, 1
      %p50 = por %p48, %p49
      %p51 = scmp.ne.s32.totalorder %s43, %s46
      %p52 = scmp.eq.s32.totalorder %s19, 0
      %p53 = por %p51, %p52
      %p54 = scmp.ne.s32.totalorder %s43, %s46
      %p55 = scmp.eq.s32.totalorder %s24, 1
      %p56 = por %p54, %p55
      %p57 = scmp.ne.s32.totalorder %s46, %s47
      %p58 = scmp.eq.s32.totalorder %s24, 0
      %p59 = por %p57, %p58
      %p60 = scmp.ne.s32.totalorder %s46, %s47
      %p61 = scmp.eq.s32.totalorder %s25, 1
      %p62 = por %p60, %p61
      %p64 = scmp.ne.s32.totalorder %s47, %s63
      %p65 = scmp.eq.s32.totalorder %s25, 0
      %p66 = por %p64, %p65
      %s68 = sadd.s32 %s67, 1
      %p71 = scmp.eq.s32.totalorder %s19, 1
      %p72 = scmp.ne.s32.totalorder %s67, %s69
      %p73 = scmp.eq.s32.totalorder %s19, 0
      %p74 = por %p72, %p73
      %p75 = scmp.ne.s32.totalorder %s67, %s69
      %p76 = scmp.eq.s32.totalorder %s24, 1
      %p77 = por %p75, %p76
      %p78 = scmp.ne.s32.totalorder %s69, %s70
      %p79 = scmp.eq.s32.totalorder %s24, 0
      %p80 = por %p78, %p79
      %p81 = scmp.ne.s32.totalorder %s69, %s70
      %p82 = scmp.eq.s32.totalorder %s25, 1
      %p83 = por %p81, %p82
      %p85 = scmp.ne.s32.totalorder %s70, %s84
      %p86 = scmp.eq.s32.totalorder %s25, 0
      %p87 = por %p85, %p86
      %s88 = ssub.s32 %s26, %s38
      %s89 = ssub.s32 %s27, %s34
      %s90 = sor.u32 %s88, %s89
      %p91 = scmp.eq.s32.totalorder %s90, 0
      %s93 = sadd.s32 %s92, 1
      %s94 = scalar_select %p91, %s92, %s93
      %p97 = pneg %p91
      %p98 = scmp.eq.s32.totalorder %s19, 1
      %p99 = por %p97, %p98
      %p100 = scmp.ne.s32.totalorder %s92, %s95
      %p101 = scmp.eq.s32.totalorder %s19, 0
      %p102 = por %p100, %p101
      %p103 = scmp.ne.s32.totalorder %s92, %s95
      %p104 = scmp.eq.s32.totalorder %s24, 1
      %p105 = por %p103, %p104
      %p106 = scmp.ne.s32.totalorder %s95, %s96
      %p107 = scmp.eq.s32.totalorder %s24, 0
      %p108 = por %p106, %p107
      %p109 = scmp.ne.s32.totalorder %s95, %s96
      %p110 = scmp.eq.s32.totalorder %s25, 1
      %p111 = por %p109, %p110
      %p113 = scmp.ne.s32.totalorder %s96, %s112
      %p114 = scmp.eq.s32.totalorder %s25, 0
      %p115 = por %p113, %p114
      %s116 = ssub.s32 %s26, %s38
      %s117 = ssub.s32 %s27, %s34
      %s118 = sor.u32 %s116, %s117
      %p119 = scmp.eq.s32.totalorder %s118, 0
      %s121 = sadd.s32 %s120, 1
      %s122 = scalar_select %p119, %s120, %s121
      %p125 = pneg %p119
      %p126 = scmp.eq.s32.totalorder %s19, 1
      %p127 = por %p125, %p126
      %p128 = scmp.ne.s32.totalorder %s120, %s123
      %p129 = scmp.eq.s32.totalorder %s19, 0
      %p130 = por %p128, %p129
      %p131 = scmp.ne.s32.totalorder %s120, %s123
      %p132 = scmp.eq.s32.totalorder %s24, 1
      %p133 = por %p131, %p132
      %p134 = scmp.ne.s32.totalorder %s123, %s124
      %p135 = scmp.eq.s32.totalorder %s24, 0
      %p136 = por %p134, %p135
      %p137 = scmp.ne.s32.totalorder %s123, %s124
      %p138 = scmp.eq.s32.totalorder %s25, 1
      %p139 = por %p137, %p138
      %p141 = scmp.ne.s32.totalorder %s124, %s140
      %p142 = scmp.eq.s32.totalorder %s25, 0
      %p143 = por %p141, %p142
      %p144 = scmp.le.s32.totalorder 1, %s19
      %p145 = scmp.lt.s32.totalorder %s19, 3
      %p146 = pnand %p144, %p145
      %p147 = pneg %p146
      // Predicated region
      $region9: #{tpu_custom_call.1} parent=5 // pred_check
        _
      $region10: #{tpu_custom_call.1} parent=5 // pred_check_branch
        %149 = sbr.rel (%p146) target = $region12
      $region11: #{tpu_custom_call.1} parent=5 // pred_region
        %s150 = ssub.s32 %s19, 1
        // Predicated region
        $region13: #{tpu_custom_call.1} parent=11 // pred_check
          %p151 = pneg %p80
        $region14: #{tpu_custom_call.1} parent=11 // pred_check_branch
          %153 = sbr.rel (%p151) target = $region16
        $region15: #{tpu_custom_call.1} parent=11 // pred_region
          _
        $region16: #{tpu_custom_call.1} parent=11 // pred_fallthru
          _
      $region12: #{tpu_custom_call.1} parent=5 // pred_fallthru
        _
      %p154 = scmp.lt.s32.totalorder %s19, 2
      // Predicated region
      $region17: #{tpu_custom_call.1} parent=5 // pred_check
        %p155 = pneg %p154
      $region18: #{tpu_custom_call.1} parent=5 // pred_check_branch
        %157 = sbr.rel (%p155) target = $region20
      $region19: #{tpu_custom_call.1} parent=5 // pred_region
        // Predicated region
        $region21: #{tpu_custom_call.1} parent=19 // pred_check
          %p158 = pneg %p53
        $region22: #{tpu_custom_call.1} parent=19 // pred_check_branch
          %160 = sbr.rel (%p158) target = $region24
        $region23: #{tpu_custom_call.1} parent=19 // pred_region
          %s161 = sand.u32 %s43, 1
          %s162 = scalar_lea.sflag [#allocation3], %s161
          %s163 = sand.u32 %s43, 1
          %s164 = smul.addr %s163, 2
          %s165 = scalar_lea.vmem [#allocation2], %s164
          %s167 = ssub.s32 32, 32
          %168 = vsyncadd %s162, %s167
          %s169 = sadd.s32 %s27, %s26
          %s170 = smul.addr %s169, 32
          %s171 = scalar_lea.hbm %s0, %s170
          %s173 = sshll.u32 %s165, 4
          %s174 = int_to_ptr.vmem [resolvable:$true] %s173
          %176 = dma.hbm_to_vmem [thread:$0]  %s171, 32, %s174, %s162
        $region24: #{tpu_custom_call.1} parent=19 // pred_fallthru
          _
      $region20: #{tpu_custom_call.1} parent=5 // pred_fallthru
        _
      %p177 = scmp.le.s32.totalorder 1, %s19
      %p178 = scmp.lt.s32.totalorder %s19, 3
      %p179 = pnand %p177, %p178
      %p180 = pneg %p179
      // Predicated region
      $region25: #{tpu_custom_call.1} parent=5 // pred_check
        _
      $region26: #{tpu_custom_call.1} parent=5 // pred_check_branch
        %182 = sbr.rel (%p179) target = $region28
      $region27: #{tpu_custom_call.1} parent=5 // pred_region
        %s183 = ssub.s32 %s19, 1
        %s184 = sand.u32 %s46, 1
        %s185 = scalar_lea.sflag [#allocation3], %s184
        %s186 = sand.u32 %s46, 1
        %s187 = smul.addr %s186, 2
        %s188 = scalar_lea.vmem [#allocation2], %s187
        // Predicated region
        $region29: #{tpu_custom_call.1} parent=27 // pred_check
          %p189 = pneg %p59
        $region30: #{tpu_custom_call.1} parent=27 // pred_check_branch
          %191 = sbr.rel (%p189) target = $region32
        $region31: #{tpu_custom_call.1} parent=27 // pred_region
          %192 = dma.done %s185, 32
        $region32: #{tpu_custom_call.1} parent=27 // pred_fallthru
          _
        %s193 = sand.u32 %s46, 1
        %s194 = scalar_lea.sflag [#allocation3], %s193
        %s195 = sand.u32 %s46, 1
        %s196 = smul.addr %s195, 2
        %s197 = scalar_lea.vmem [#allocation2], %s196
        %p198 = pneg %p59
        %p199 = pneg %p56
        %p200 = pneg %p80
        %p201 = pneg %p77
        %p202 = pneg %p108
        %p203 = pneg %p105
        %s204 = sand.u32 %s95, 1
        %s205 = scalar_lea.sflag [#allocation4], %s204
        %s206 = sand.u32 %s95, 1
        %s207 = scalar_lea.vmem [#allocation5], %s206
        %p208 = pneg %p136
        %p209 = pneg %p133
        %s210 = sand.u32 %s123, 1
        %s211 = scalar_lea.sflag [#allocation7], %s210
        %s212 = sand.u32 %s123, 1
        %s213 = scalar_lea.vmem [#allocation6], %s212
        %v214 = vld [vmem:[%s188] sm:$0x3]
        %v215 = vcvt.s32.f32 %v214
        %v216 = vld [vmem:[%s1] sm:$0x1]
        %v217 = vlaneseq
        %v218 = vand.u32 %v217, 127
        %220 = vset.pattern.permute.xlu0 0
        %221 = vperm.xlu0 %220, %v215
        %v222 = vpop.permute.xlu0 %221
        %vm224 = vcmp.ge.s32.totalorder %v218, 32
        %225 = vset.pattern.permute.xlu0 1
        %226 = vperm.xlu0 %225, %v215
        %v227 = vpop.permute.xlu0 %226
        %v229 = vsel %vm224, %v227, %v222
        %vm230 = vcmp.ge.s32.totalorder %v218, 64
        %231 = vset.pattern.permute.xlu0 2
        %232 = vperm.xlu0 %231, %v215
        %v233 = vpop.permute.xlu0 %232
        %v235 = vsel %vm230, %v233, %v229
        %vm236 = vcmp.ge.s32.totalorder %v218, 96
        %237 = vset.pattern.permute.xlu0 3
        %238 = vperm.xlu0 %237, %v215
        %v239 = vpop.permute.xlu0 %238
        %v241 = vsel %vm236, %v239, %v235
        %v243 = vlaneseq
        %v244 = vshrl.u32 %v243, 7
        %v245 = vsub.s32 0, %v244
        %v246 = vrot.slane %v216, %v245
        %v248 = vmul.f32 %v241, %v246
        %v249 = vand.u32 2147483647, %v248
        %vm250 = vcmp.le.f32.partialorder %v249, 0.7853982
        %vm251 = vcmp.lt.s32.totalorder %v248, 0
        %v252 = vand.u32 %v248, 2139095040
        %v253 = vshrl.u32 %v252, 23
        %v254 = vsub.s32 %v253, 127
        %v255 = vand.u32 2147483647, %v248
        %v256 = vand.u32 %v255, 8388607
        %v257 = vor.u32 %v256, 8388608
        %v258 = vsub.s32 0, %v257
        %v259 = vadd.s32 %v254, 1
        %vm260 = vcmp.gt.s32.totalorder %v259, 0
        %v261 = vsel %vm260, %v259, 0
        %v262 = vshrl.u32 %v261, 5
        %v263 = vand.u32 %v261, 31
        %v264 = vsub.s32 32, %v263
        %v265 = vshrl.u32 683565275, %v264
        %v266 = vshll.u32 683565275, %v263
        %v267 = vshrl.u32 2475754826, %v264
        %v268 = vor.u32 %v266, %v267
        %v269 = vshll.u32 2475754826, %v263
        %v270 = vshrl.u32 2131351028, %v264
        %v271 = vor.u32 %v269, %v270
        %v272 = vshll.u32 2131351028, %v263
        %v273 = vshrl.u32 2102212464, %v264
        %v274 = vor.u32 %v272, %v273
        %v275 = vshll.u32 2102212464, %v263
        %v276 = vshrl.u32 920167782, %v264
        %v277 = vor.u32 %v275, %v276
        %v278 = vshll.u32 920167782, %v263
        %v279 = vshrl.u32 1326507024, %v264
        %v280 = vor.u32 %v278, %v279
        %vm281 = vcmp.lt.s32.totalorder %v262, 1
        %vm282 = vcmp.lt.s32.totalorder %v262, 2
        %vm283 = vcmp.lt.s32.totalorder %v262, 3
        %vm284 = vcmp.lt.s32.totalorder %v262, 4
        %v285 = vsel %vm281, %v265, %v268
        %v286 = vsel %vm284, %v274, 2102212464
        %v287 = vsel %vm283, %v271, %v286
        %v288 = vsel %vm282, %v285, %v287
        %v289 = vsel %vm281, %v268, %v271
        %v290 = vsel %vm284, %v277, 920167782
        %v291 = vsel %vm283, %v274, %v290
        %v292 = vsel %vm282, %v289, %v291
        %v293 = vsel %vm281, %v271, %v274
        %v294 = vsel %vm284, %v280, 1326507024
        %v295 = vsel %vm283, %v277, %v294
        %v296 = vsel %vm282, %v293, %v295
        %v297 = vshll.u32 %v257, 8
        %v298 = vmul.u32.u64.compose %v297, %v296
        %v299 = vextract.low.u32 %v298
        %v300 = vextract.high.u32 %v298
        %v301 = vmul.u32.u64.compose %v297, %v292
        %v302 = vextract.low.u32 %v301
        %v303 = vextract.high.u32 %v301
        %v304 = vmul.u32 %v297, %v288
        %v305 = vadd.s32 %v300, %v302
        %vm306 = vc.u32 %v300, %v302
        %v307 = vadd.s32 %v303, 1
        %v308 = vsel %vm306, %v307, %v303
        %v309 = vadd.s32 %v304, %v308
        %v310 = vadd.s32 %v309, 536870912
        %v311 = vshrl.u32 %v310, 30
        %v312 = vshll.u32 %v311, 30
        %v313 = vsub.s32 %v309, %v312
        %vm314 = vcmp.lt.s32.totalorder %v313, 0
        %v315 = vsub.s32 0, %v313
        %v316 = vsel %vm314, %v315, %v313
        %v317 = vclz %v316
        %v318 = vsub.s32 %v317, 2
        %vm319 = vcmp.gt.s32.totalorder 0, %v318
        %v320 = vsel %vm319, 0, %v318
        %v321 = vsub.s32 32, %v320
        %v322 = vshll.u32 %v313, %v320
        %v323 = vshrl.u32 %v305, %v321
        %v324 = vor.u32 %v322, %v323
        %v325 = vsub.s32 4294967266, %v320
        %v326 = vadd.s32 %v325, 127
        %v327 = vshll.u32 %v326, 23
        %v328 = vor.u32 4788187, %v327
        %v329 = vand.u32 2147483647, %v328
        %v331 = vcvt.s32.f32 %v324
        %v332 = vmul.f32 %v331, %v329
        %v333 = vxor.u32 %v332, 2147483648
        %v334 = vsel %vm251, %v333, %v332
        %v335 = vsub.s32 4, %v311
        %v336 = vsel %vm251, %v335, %v311
        %v337 = vsel %vm250, %v248, %v334
        %v338 = vsel %vm250, 0, %v336
        %v339 = vcosq.f32.pop %v337
        %v340 = vsinq.f32.pop %v337
        %vm341 = vweird.f32 %v248
        %v342 = vand.u32 %v338, 3
        %vm343 = vcmp.lt.s32.totalorder %v342, 2
        %vm344 = vcmp.eq.s32.totalorder %v342, 0
        %v345 = vxor.u32 %v340, 2147483648
        %v346 = vsel %vm344, %v339, %v345
        %vm347 = vcmp.eq.s32.totalorder %v342, 2
        %v348 = vxor.u32 %v339, 2147483648
        %v349 = vsel %vm347, %v348, %v340
        %v350 = vsel %vm343, %v346, %v349
        %v351 = vsel %vm341, nan, %v350
        %v352 = vpack.c.bf16 %v351, %v351
        %353 = vst [vmem:[%s207] sm:$0x1] %v352
        %v354 = vand.u32 2147483647, %v248
        %vm355 = vcmp.le.f32.partialorder %v354, 0.7853982
        %vm356 = vcmp.lt.s32.totalorder %v248, 0
        %v357 = vand.u32 %v248, 2139095040
        %v358 = vshrl.u32 %v357, 23
        %v359 = vsub.s32 %v358, 127
        %v360 = vand.u32 2147483647, %v248
        %v361 = vand.u32 %v360, 8388607
        %v362 = vor.u32 %v361, 8388608
        %v363 = vsub.s32 0, %v362
        %v364 = vadd.s32 %v359, 1
        %vm365 = vcmp.gt.s32.totalorder %v364, 0
        %v366 = vsel %vm365, %v364, 0
        %v367 = vshrl.u32 %v366, 5
        %v368 = vand.u32 %v366, 31
        %v369 = vsub.s32 32, %v368
        %v370 = vshrl.u32 683565275, %v369
        %v371 = vshll.u32 683565275, %v368
        %v372 = vshrl.u32 2475754826, %v369
        %v373 = vor.u32 %v371, %v372
        %v374 = vshll.u32 2475754826, %v368
        %v375 = vshrl.u32 2131351028, %v369
        %v376 = vor.u32 %v374, %v375
        %v377 = vshll.u32 2131351028, %v368
        %v378 = vshrl.u32 2102212464, %v369
        %v379 = vor.u32 %v377, %v378
        %v380 = vshll.u32 2102212464, %v368
        %v381 = vshrl.u32 920167782, %v369
        %v382 = vor.u32 %v380, %v381
        %v383 = vshll.u32 920167782, %v368
        %v384 = vshrl.u32 1326507024, %v369
        %v385 = vor.u32 %v383, %v384
        %vm386 = vcmp.lt.s32.totalorder %v367, 1
        %vm387 = vcmp.lt.s32.totalorder %v367, 2
        %vm388 = vcmp.lt.s32.totalorder %v367, 3
        %vm389 = vcmp.lt.s32.totalorder %v367, 4
        %v390 = vsel %vm386, %v370, %v373
        %v391 = vsel %vm389, %v379, 2102212464
        %v392 = vsel %vm388, %v376, %v391
        %v393 = vsel %vm387, %v390, %v392
        %v394 = vsel %vm386, %v373, %v376
        %v395 = vsel %vm389, %v382, 920167782
        %v396 = vsel %vm388, %v379, %v395
        %v397 = vsel %vm387, %v394, %v396
        %v398 = vsel %vm386, %v376, %v379
        %v399 = vsel %vm389, %v385, 1326507024
        %v400 = vsel %vm388, %v382, %v399
        %v401 = vsel %vm387, %v398, %v400
        %v402 = vshll.u32 %v362, 8
        %v403 = vmul.u32.u64.compose %v402, %v401
        %v404 = vextract.low.u32 %v403
        %v405 = vextract.high.u32 %v403
        %v406 = vmul.u32.u64.compose %v402, %v397
        %v407 = vextract.low.u32 %v406
        %v408 = vextract.high.u32 %v406
        %v409 = vmul.u32 %v402, %v393
        %v410 = vadd.s32 %v405, %v407
        %vm411 = vc.u32 %v405, %v407
        %v412 = vadd.s32 %v408, 1
        %v413 = vsel %vm411, %v412, %v408
        %v414 = vadd.s32 %v409, %v413
        %v415 = vadd.s32 %v414, 536870912
        %v416 = vshrl.u32 %v415, 30
        %v417 = vshll.u32 %v416, 30
        %v418 = vsub.s32 %v414, %v417
        %vm419 = vcmp.lt.s32.totalorder %v418, 0
        %v420 = vsub.s32 0, %v418
        %v421 = vsel %vm419, %v420, %v418
        %v422 = vclz %v421
        %v423 = vsub.s32 %v422, 2
        %vm424 = vcmp.gt.s32.totalorder 0, %v423
        %v425 = vsel %vm424, 0, %v423
        %v426 = vsub.s32 32, %v425
        %v427 = vshll.u32 %v418, %v425
        %v428 = vshrl.u32 %v410, %v426
        %v429 = vor.u32 %v427, %v428
        %v430 = vsub.s32 4294967266, %v425
        %v431 = vadd.s32 %v430, 127
        %v432 = vshll.u32 %v431, 23
        %v433 = vor.u32 4788187, %v432
        %v434 = vand.u32 2147483647, %v433
        %v436 = vcvt.s32.f32 %v429
        %v437 = vmul.f32 %v436, %v434
        %v438 = vxor.u32 %v437, 2147483648
        %v439 = vsel %vm356, %v438, %v437
        %v440 = vsub.s32 4, %v416
        %v441 = vsel %vm356, %v440, %v416
        %v442 = vsel %vm355, %v248, %v439
        %v443 = vsel %vm355, 0, %v441
        %v444 = vcosq.f32.pop %v442
        %v445 = vsinq.f32.pop %v442
        %vm446 = vweird.f32 %v248
        %v447 = vadd.s32 %v443, 3
        %v448 = vand.u32 %v447, 3
        %vm449 = vcmp.lt.s32.totalorder %v448, 2
        %vm450 = vcmp.eq.s32.totalorder %v448, 0
        %v451 = vxor.u32 %v445, 2147483648
        %v452 = vsel %vm450, %v444, %v451
        %vm453 = vcmp.eq.s32.totalorder %v448, 2
        %v454 = vxor.u32 %v444, 2147483648
        %v455 = vsel %vm453, %v454, %v445
        %v456 = vsel %vm449, %v452, %v455
        %v457 = vsel %vm446, nan, %v456
        %v458 = vpack.c.bf16 %v457, %v457
        %459 = vst [vmem:[%s213] sm:$0x1] %v458
        %s460 = sand.u32 %s95, 1
        %s461 = scalar_lea.sflag [#allocation4], %s460
        %s462 = sand.u32 %s95, 1
        %s463 = scalar_lea.vmem [#allocation5], %s462
        %s464 = sand.u32 %s123, 1
        %s465 = scalar_lea.sflag [#allocation7], %s464
        %s466 = sand.u32 %s123, 1
        %s467 = scalar_lea.vmem [#allocation6], %s466
        // Predicated region
        $region33: #{tpu_custom_call.1} parent=27 // pred_check
          %p468 = pneg %p105
        $region34: #{tpu_custom_call.1} parent=27 // pred_check_branch
          %470 = sbr.rel (%p468) target = $region36
        $region35: #{tpu_custom_call.1} parent=27 // pred_region
          %s472 = ssub.s32 16, 16
          %473 = vsyncadd %s461, %s472
          %s474 = sadd.s32 %s29, %s28
          %s475 = smul.addr %s474, 16
          %s476 = scalar_lea.hbm %s2, %s475
          %s478 = sshll.u32 %s463, 4
          %s479 = int_to_ptr.vmem [resolvable:$true] %s478
          %481 = dma.vmem_to_hbm [thread:$0]  %s479, 16, %s476, %s461
        $region36: #{tpu_custom_call.1} parent=27 // pred_fallthru
          _
        // Predicated region
        $region37: #{tpu_custom_call.1} parent=27 // pred_check
          %p482 = pneg %p133
        $region38: #{tpu_custom_call.1} parent=27 // pred_check_branch
          %484 = sbr.rel (%p482) target = $region40
        $region39: #{tpu_custom_call.1} parent=27 // pred_region
          %s486 = ssub.s32 16, 16
          %487 = vsyncadd %s465, %s486
          %s488 = sadd.s32 %s29, %s28
          %s489 = smul.addr %s488, 16
          %s490 = scalar_lea.hbm %s3, %s489
          %s492 = sshll.u32 %s467, 4
          %s493 = int_to_ptr.vmem [resolvable:$true] %s492
          %495 = dma.vmem_to_hbm [thread:$0]  %s493, 16, %s490, %s465
        $region40: #{tpu_custom_call.1} parent=27 // pred_fallthru
          _
      $region28: #{tpu_custom_call.1} parent=5 // pred_fallthru
        _
      %p496 = scmp.le.s32.totalorder 2, %s19
      // Predicated region
      $region41: #{tpu_custom_call.1} parent=5 // pred_check
        %p497 = pneg %p496
      $region42: #{tpu_custom_call.1} parent=5 // pred_check_branch
        %499 = sbr.rel (%p497) target = $region44
      $region43: #{tpu_custom_call.1} parent=5 // pred_region
        %s500 = ssub.s32 %s19, 2
        // Predicated region
        $region45: #{tpu_custom_call.1} parent=43 // pred_check
          %p501 = pneg %p111
        $region46: #{tpu_custom_call.1} parent=43 // pred_check_branch
          %503 = sbr.rel (%p501) target = $region48
        $region47: #{tpu_custom_call.1} parent=43 // pred_region
          %s504 = sand.u32 %s96, 1
          %s505 = scalar_lea.sflag [#allocation4], %s504
          %s506 = sand.u32 %s96, 1
          %s507 = scalar_lea.vmem [#allocation5], %s506
          %508 = dma.done %s505, 16
        $region48: #{tpu_custom_call.1} parent=43 // pred_fallthru
          _
        // Predicated region
        $region49: #{tpu_custom_call.1} parent=43 // pred_check
          %p509 = pneg %p139
        $region50: #{tpu_custom_call.1} parent=43 // pred_check_branch
          %511 = sbr.rel (%p509) target = $region52
        $region51: #{tpu_custom_call.1} parent=43 // pred_region
          %s512 = sand.u32 %s124, 1
          %s513 = scalar_lea.sflag [#allocation7], %s512
          %s514 = sand.u32 %s124, 1
          %s515 = scalar_lea.vmem [#allocation6], %s514
          %516 = dma.done %s513, 16
        $region52: #{tpu_custom_call.1} parent=43 // pred_fallthru
          _
      $region44: #{tpu_custom_call.1} parent=5 // pred_fallthru
        _
    $region6: #{tpu_custom_call.1} parent=1 // loop_footer
      %s23 = sadd.s32 1, %s19
    $region7: #{tpu_custom_call.1} parent=1 // loop_footer_branch
      %18 = sbr.rel target = $region3
    $region8: #{tpu_custom_call.1} parent=1 // loop_exit
      _
    %517 = vsyncpa [#allocation3], 1
    %s518 = scalar_lea.sflag [#allocation3], 1
    %519 = vsyncpa %s518, 1
    %520 = vsyncpa [#allocation4], 1
    %s521 = scalar_lea.sflag [#allocation4], 1
    %522 = vsyncpa %s521, 1
    %523 = vsyncpa [#allocation7], 1
    %s524 = scalar_lea.sflag [#allocation7], 1
    %525 = vsyncpa %s524, 1

</llo_original>
